<compile_context>
chip_gen: v5e
topology: v5e:2x2
jax: 0.10.0
libtpu: 0.0.40
codegen_flags: <defaults>
</compile_context>

<pallas_src>
import math

import jax
import jax.numpy as jnp
from jax import lax
from jax.experimental import pallas as pl
from jax.experimental.pallas import tpu as pltpu

BN_EPS = 1e-5
LANE = 128


def _round_up(n, m):
    return ((n + m - 1) // m) * m


def _make_kernel(hidden_dim, out_pad):
    def kernel(x_ref, w1_ref, w2_ref, w3_ref, bias_ref, o_ref):
        # fc1 (+ folded bn1) + ReLU. bf16 operands, f32 accumulation on the MXU.
        h = jnp.dot(x_ref[...], w1_ref[...], preferred_element_type=jnp.float32)
        h = jnp.maximum(h + bias_ref[0:1, :hidden_dim], 0.0)

        # fc2 (+ folded bn2) + ReLU.
        h = jnp.dot(h.astype(jnp.bfloat16), w2_ref[...],
                    preferred_element_type=jnp.float32)
        h = jnp.maximum(h + bias_ref[1:2, :hidden_dim], 0.0)

        # fc3 (output dim zero-padded to a lane-dense multiple of 128).
        out = jnp.dot(h.astype(jnp.bfloat16), w3_ref[...],
                      preferred_element_type=jnp.float32)
        o_ref[...] = (out + bias_ref[2:3, :out_pad]).astype(o_ref.dtype)

    return kernel


def _fold_and_pack_params(params):
    """Fold BN into the adjacent Linear, pad fc3 to lane width, pack biases."""
    (w1, b1, g1, be1, m1, v1,
     w2, b2, g2, be2, m2, v2,
     w3, b3) = params

    # BatchNorm (inference) folding, done in f32 on static weights.
    s1 = g1 * lax.rsqrt(v1 + BN_EPS)            # (1, H)
    w1f = w1 * s1                               # columnwise scale
    b1f = (b1 - m1) * s1 + be1
    s2 = g2 * lax.rsqrt(v2 + BN_EPS)
    w2f = w2 * s2
    b2f = (b2 - m2) * s2 + be2

    hidden_dim = w1.shape[1]
    out_dim = w3.shape[1]
    out_pad = _round_up(out_dim, LANE)

    # Zero-pad fc3 to a lane-dense output width.
    w3p = jnp.zeros((w3.shape[0], out_pad), jnp.float32).at[:, :out_dim].set(w3)
    b3p = jnp.zeros((1, out_pad), jnp.float32).at[:, :out_dim].set(b3)

    # Single packed bias operand (f32): rows = [b1', b2', b3_pad].
    width = max(hidden_dim, out_pad)
    bias = jnp.zeros((3, width), jnp.float32)
    bias = bias.at[0, :hidden_dim].set(b1f[0])
    bias = bias.at[1, :hidden_dim].set(b2f[0])
    bias = bias.at[2, :out_pad].set(b3p[0])

    # bf16 weights for the MXU; accumulation stays f32 in-kernel.
    return (w1f.astype(jnp.bfloat16),
            w2f.astype(jnp.bfloat16),
            w3p.astype(jnp.bfloat16),
            bias, hidden_dim, out_dim, out_pad)


def analog_mlp_forward(x_nchw, params):
    """x_nchw: (B, C, H, W) float32. Returns (B, output_dim) float32."""
    B = x_nchw.shape[0]
    x_flat = x_nchw.reshape(B, -1).astype(jnp.bfloat16)   # Flatten(start_dim=1)

    w1, w2, w3, bias, hidden_dim, out_dim, out_pad = _fold_and_pack_params(params)
    d_in = w1.shape[0]

    flops = 2 * B * (d_in * hidden_dim + hidden_dim * hidden_dim
                     + hidden_dim * out_pad)
    bytes_accessed = (x_flat.size * 2 + w1.size * 2 + w2.size * 2 + w3.size * 2
                      + bias.size * 4 + B * out_pad * 4)

    out_padded = pl.pallas_call(
        _make_kernel(hidden_dim, out_pad),
        out_shape=jax.ShapeDtypeStruct((B, out_pad), jnp.float32),
        in_specs=[pl.BlockSpec(memory_space=pltpu.MemorySpace.VMEM)] * 5,
        out_specs=pl.BlockSpec(memory_space=pltpu.MemorySpace.VMEM),
        cost_estimate=pl.CostEstimate(
            flops=flops, transcendentals=0, bytes_accessed=bytes_accessed),
    )(x_flat, w1, w2, w3, bias)

    return out_padded[:, :out_dim]


def _reference_forward_f32(x_nchw, params):
    """Pure-JAX f32 reference for the original module semantics."""
    (w1, b1, g1, be1, m1, v1,
     w2, b2, g2, be2, m2, v2,
     w3, b3) = params
    x = x_nchw.reshape(x_nchw.shape[0], -1)
    h = x @ w1 + b1
    h = (h - m1) * (g1 / jnp.sqrt(v1 + BN_EPS)) + be1
    h = jnp.maximum(h, 0.0)
    h = h @ w2 + b2
    h = (h - m2) * (g2 / jnp.sqrt(v2 + BN_EPS)) + be2
    h = jnp.maximum(h, 0.0)
    return h @ w3 + b3


def _reference_forward_bf16(x_nchw, params):
    """Mirrors the kernel's bf16-weight / f32-accumulate path exactly."""
    w1, w2, w3, bias, hidden_dim, out_dim, out_pad = _fold_and_pack_params(params)
    x = x_nchw.reshape(x_nchw.shape[0], -1).astype(jnp.bfloat16)
    h = jnp.dot(x, w1, preferred_element_type=jnp.float32)
    h = jnp.maximum(h + bias[0:1, :hidden_dim], 0.0)
    h = jnp.dot(h.astype(jnp.bfloat16), w2, preferred_element_type=jnp.float32)
    h = jnp.maximum(h + bias[1:2, :hidden_dim], 0.0)
    out = jnp.dot(h.astype(jnp.bfloat16), w3, preferred_element_type=jnp.float32)
    return (out + bias[2:3, :out_pad])[:, :out_dim]


def init_params(key, input_size, hidden_dim, output_dim):
    d_in = math.prod(list(input_size))
    ks = jax.random.split(key, 10)

    def linear_init(kw, kb, fan_in, fan_out):
        # PyTorch nn.Linear default init: U(-1/sqrt(fan_in), 1/sqrt(fan_in)).
        bound = 1.0 / math.sqrt(fan_in)
        # Stored already transposed: (in, out)  (torch stores (out, in)).
        w = jax.random.uniform(kw, (fan_in, fan_out), jnp.float32, -bound, bound)
        b = jax.random.uniform(kb, (1, fan_out), jnp.float32, -bound, bound)
        return w, b

    w1, b1 = linear_init(ks[0], ks[1], d_in, hidden_dim)
    w2, b2 = linear_init(ks[2], ks[3], hidden_dim, hidden_dim)
    w3, b3 = linear_init(ks[4], ks[5], hidden_dim, output_dim)

    def bn_init(kg, kb2, km, kv, dim):
        gamma = 1.0 + 0.1 * jax.random.normal(kg, (1, dim), jnp.float32)
        beta = 0.1 * jax.random.normal(kb2, (1, dim), jnp.float32)
        mean = 0.1 * jax.random.normal(km, (1, dim), jnp.float32)
        var = jnp.abs(1.0 + 0.1 * jax.random.normal(kv, (1, dim), jnp.float32))
        return gamma, beta, mean, var

    kbn = jax.random.split(ks[6], 8)
    g1, be1, m1, v1 = bn_init(kbn[0], kbn[1], kbn[2], kbn[3], hidden_dim)
    g2, be2, m2, v2 = bn_init(kbn[4], kbn[5], kbn[6], kbn[7], hidden_dim)

    return (w1, b1, g1, be1, m1, v1,
            w2, b2, g2, be2, m2, v2,
            w3, b3)


if __name__ == "__main__":
    # Small shapes: batch=2, input_size=(4, 16, 16) -> flattened 1024,
    # hidden_dim=128, output_dim=10 (padded to 128 inside the wrapper).
    key = jax.random.PRNGKey(0)
    kx, kp = jax.random.split(key)

    input_size = (4, 16, 16)
    hidden_dim = 128
    output_dim = 10
    batch = 2

    x = jax.random.normal(kx, (batch, *input_size), jnp.float32)
    params = init_params(kp, input_size, hidden_dim, output_dim)

    out = analog_mlp_forward(x, params)
    out = jax.block_until_ready(out)

    assert out.shape == (batch, output_dim)
    assert bool(jnp.all(jnp.isfinite(out)))

    # Tight check against a reference that mirrors the kernel's numerics
    # (bf16 weights, f32 accumulation, BN folded).
    ref_exact = _reference_forward_bf16(x, params)
    assert jnp.allclose(out, ref_exact, atol=2e-3, rtol=2e-3), "bf16-path mismatch"

    # Loose check against the full-precision module semantics (bf16 weights
    # introduce ~1e-2-level absolute differences; this is expected precision
    # change, not a bug).
    ref_f32 = _reference_forward_f32(x, params)
    assert jnp.allclose(out, ref_f32, atol=8e-2, rtol=8e-2), "f32 semantic mismatch"

    print("KERNEL_OK")
</pallas_src>

<mosaic_0001>
module attributes {stable_mosaic.version = 11 : i64} {
  func.func @kernel(%arg0: memref<2x1024xbf16, #tpu.memory_space<vmem>>, %arg1: memref<1024x128xbf16, #tpu.memory_space<vmem>>, %arg2: memref<128x128xbf16, #tpu.memory_space<vmem>>, %arg3: memref<128x128xbf16, #tpu.memory_space<vmem>>, %arg4: memref<3x128xf32, #tpu.memory_space<vmem>>, %arg5: memref<2x128xf32, #tpu.memory_space<vmem>>) attributes {dimension_semantics = [], scalar_prefetch = 0 : i64, scratch_operands = 0 : i64, tpu.core_type = #tpu.core_type<tc>} {
    %c0 = arith.constant 0 : index
    %c0_0 = arith.constant 0 : index
    %0 = vector.load %arg0[%c0, %c0_0] : memref<2x1024xbf16, #tpu.memory_space<vmem>>, vector<2x1024xbf16>
    %c0_1 = arith.constant 0 : index
    %c0_2 = arith.constant 0 : index
    %1 = vector.load %arg1[%c0_1, %c0_2] : memref<1024x128xbf16, #tpu.memory_space<vmem>>, vector<1024x128xbf16>
    %cst = arith.constant dense<0.000000e+00> : vector<2x128xf32>
    %2 = tpu.matmul %0, %1, %cst {dimension_numbers = #tpu.dot_dimension_numbers<[1], [0], [0], [1], [0, 0, 1, 1], [], []>} : vector<2x1024xbf16>, vector<1024x128xbf16>, vector<2x128xf32> -> vector<2x128xf32>
    %c0_3 = arith.constant 0 : index
    %c0_4 = arith.constant 0 : index
    %3 = vector.load %arg4[%c0_3, %c0_4] : memref<3x128xf32, #tpu.memory_space<vmem>>, vector<1x128xf32>
    %4 = vector.broadcast %3 : vector<1x128xf32> to vector<2x128xf32>
    %5 = arith.addf %2, %4 : vector<2x128xf32>
    %cst_5 = arith.constant 0.000000e+00 : f32
    %6 = vector.broadcast %cst_5 : f32 to vector<2x128xf32>
    %7 = arith.maximumf %5, %6 : vector<2x128xf32>
    %8 = arith.truncf %7 : vector<2x128xf32> to vector<2x128xbf16>
    %c0_6 = arith.constant 0 : index
    %c0_7 = arith.constant 0 : index
    %9 = vector.load %arg2[%c0_6, %c0_7] : memref<128x128xbf16, #tpu.memory_space<vmem>>, vector<128x128xbf16>
    %cst_8 = arith.constant dense<0.000000e+00> : vector<2x128xf32>
    %10 = tpu.matmul %8, %9, %cst_8 {dimension_numbers = #tpu.dot_dimension_numbers<[1], [0], [0], [1], [0, 0, 1, 1], [], []>} : vector<2x128xbf16>, vector<128x128xbf16>, vector<2x128xf32> -> vector<2x128xf32>
    %c1 = arith.constant 1 : index
    %c0_9 = arith.constant 0 : index
    %11 = vector.load %arg4[%c1, %c0_9] : memref<3x128xf32, #tpu.memory_space<vmem>>, vector<1x128xf32>
    %12 = vector.broadcast %11 : vector<1x128xf32> to vector<2x128xf32>
    %13 = arith.addf %10, %12 : vector<2x128xf32>
    %cst_10 = arith.constant 0.000000e+00 : f32
    %14 = vector.broadcast %cst_10 : f32 to vector<2x128xf32>
    %15 = arith.maximumf %13, %14 : vector<2x128xf32>
    %16 = arith.truncf %15 : vector<2x128xf32> to vector<2x128xbf16>
    %c0_11 = arith.constant 0 : index
    %c0_12 = arith.constant 0 : index
    %17 = vector.load %arg3[%c0_11, %c0_12] : memref<128x128xbf16, #tpu.memory_space<vmem>>, vector<128x128xbf16>
    %cst_13 = arith.constant dense<0.000000e+00> : vector<2x128xf32>
    %18 = tpu.matmul %16, %17, %cst_13 {dimension_numbers = #tpu.dot_dimension_numbers<[1], [0], [0], [1], [0, 0, 1, 1], [], []>} : vector<2x128xbf16>, vector<128x128xbf16>, vector<2x128xf32> -> vector<2x128xf32>
    %c2 = arith.constant 2 : index
    %c0_14 = arith.constant 0 : index
    %19 = vector.load %arg4[%c2, %c0_14] : memref<3x128xf32, #tpu.memory_space<vmem>>, vector<1x128xf32>
    %20 = vector.broadcast %19 : vector<1x128xf32> to vector<2x128xf32>
    %21 = arith.addf %18, %20 : vector<2x128xf32>
    %c0_15 = arith.constant 0 : index
    %c0_16 = arith.constant 0 : index
    %22 = vector.load %arg5[%c0_15, %c0_16] : memref<2x128xf32, #tpu.memory_space<vmem>>, vector<2x128xf32>
    tpu.vector_store %arg5[%c0_15, %c0_16], %21 {strides = array<i32>} : memref<2x128xf32, #tpu.memory_space<vmem>>, vector<2x128xf32>,
    return
  }
}

</mosaic_0001>

<llo_original>
// kernel: tpu_custom_call.1
$region0: #{tpu_custom_call.1}
  #allocation0 [shape = 'u32[]', space=smem, size = 0x4, offset = 0x4, fixed_abs, tag = 'smem constant byte address 0x4 - core index']
  #allocation1 [shape = 'u32[72,128]{1,0:T(1,128)}', space=vmem, size = 0x9000, scoped, tag = 'internal scratch']
  %s0 = inlined_call_operand.hbm [shape: bf16[2,1024], index: 0, kind: input, shape index: {}]
  %s1 = inlined_call_operand.hbm [shape: bf16[1024,128], index: 1, kind: input, shape index: {}]
  %s2 = inlined_call_operand.hbm [shape: bf16[128,128], index: 2, kind: input, shape index: {}]
  %s3 = inlined_call_operand.hbm [shape: bf16[128,128], index: 3, kind: input, shape index: {}]
  %s4 = inlined_call_operand.hbm [shape: f32[3,128], index: 4, kind: input, shape index: {}]
  %s5 = inlined_call_operand.hbm [shape: f32[2,128], index: 5, kind: output, shape index: {}]
  %s6 = sld [smem:[#allocation0]]
  $region50: #{tpu_custom_call.1} parent=0
    _
  %s8 = ssub.s32 1, %s6
  %s9 = scalar_select 0, %s8, %s6
  $region1: #{tpu_custom_call.1} parent=0
    #allocation2 [shape = 'u8[4096]{0}', space=vmem, size = 0x1000, scoped, tag = 'input window, operand 0, single buffered']
    #allocation3 [shape = 's32[1]{0}', space=sflag, size = 0x4, scoped, tag = 'scoped memory for tpu_custom_call.1']
    #allocation4 [shape = 's32[1]{0}', space=sflag, size = 0x4, scoped, tag = 'scoped memory for tpu_custom_call.1']
    #allocation5 [shape = 'u8[262144]{0}', space=vmem, size = 0x40000, scoped, tag = 'input window, operand 1, single buffered']
    #allocation6 [shape = 's32[1]{0}', space=sflag, size = 0x4, scoped, tag = 'scoped memory for tpu_custom_call.1']
    #allocation7 [shape = 'u8[32768]{0}', space=vmem, size = 0x8000, scoped, tag = 'input window, operand 2, single buffered']
    #allocation8 [shape = 'u8[32768]{0}', space=vmem, size = 0x8000, scoped, tag = 'input window, operand 3, single buffered']
    #allocation9 [shape = 's32[1]{0}', space=sflag, size = 0x4, scoped, tag = 'scoped memory for tpu_custom_call.1']
    #allocation10 [shape = 'u8[2048]{0}', space=vmem, size = 0x800, scoped, tag = 'input window, operand 4, single buffered']
    #allocation11 [shape = 'u8[1024]{0}', space=vmem, size = 0x400, scoped, tag = 'output window, operand 0, single buffered']
    %10 = vsyncpa [#allocation3], 0
    %11 = vsyncpa [#allocation6], 0
    %12 = vsyncpa [#allocation9], 0
    %13 = vsyncpa [#allocation4], 0
    // Predicated region
    $region2: #{tpu_custom_call.1} parent=1 // pred_check
      _
    $region3: #{tpu_custom_call.1} parent=1 // pred_check_branch
      %15 = sbr.rel (0) target = $region5
    $region4: #{tpu_custom_call.1} parent=1 // pred_region
      %17 = vsyncadd [#allocation3], 0
      %s19 = sshll.u32 %s0, 4
      %s20 = int_to_ptr.hbm [resolvable:$true] %s19
      %s21 = sshll.u32 [#allocation2], 4
      %s22 = int_to_ptr.vmem [resolvable:$true] %s21
      %24 = dma.hbm_to_vmem [thread:$0]  %s20, 128, %s22, [#allocation3]
    $region5: #{tpu_custom_call.1} parent=1 // pred_fallthru
      _
    // Predicated region
    $region6: #{tpu_custom_call.1} parent=1 // pred_check
      _
    $region7: #{tpu_custom_call.1} parent=1 // pred_check_branch
      %26 = sbr.rel (0) target = $region9
    $region8: #{tpu_custom_call.1} parent=1 // pred_region
      %28 = vsyncadd [#allocation6], 0
      %s29 = sshll.u32 %s1, 4
      %s30 = int_to_ptr.hbm [resolvable:$true] %s29
      %s31 = sshll.u32 [#allocation5], 4
      %s32 = int_to_ptr.vmem [resolvable:$true] %s31
      %37 = dma.hbm_to_vmem [thread:$0]  %s30, 8192, %s32, [#allocation6], 64, 64, 4
    $region9: #{tpu_custom_call.1} parent=1 // pred_fallthru
      _
    // Predicated region
    $region10: #{tpu_custom_call.1} parent=1 // pred_check
      _
    $region11: #{tpu_custom_call.1} parent=1 // pred_check_branch
      %39 = sbr.rel (0) target = $region13
    $region12: #{tpu_custom_call.1} parent=1 // pred_region
      %41 = vsyncadd [#allocation6], 0
      %s42 = sshll.u32 %s2, 4
      %s43 = int_to_ptr.hbm [resolvable:$true] %s42
      %s44 = sshll.u32 [#allocation7], 4
      %s45 = int_to_ptr.vmem [resolvable:$true] %s44
      %50 = dma.hbm_to_vmem [thread:$0]  %s43, 1024, %s45, [#allocation6], 64, 64, 4
    $region13: #{tpu_custom_call.1} parent=1 // pred_fallthru
      _
    // Predicated region
    $region14: #{tpu_custom_call.1} parent=1 // pred_check
      _
    $region15: #{tpu_custom_call.1} parent=1 // pred_check_branch
      %52 = sbr.rel (0) target = $region17
    $region16: #{tpu_custom_call.1} parent=1 // pred_region
      %54 = vsyncadd [#allocation9], 0
      %s55 = sshll.u32 %s3, 4
      %s56 = int_to_ptr.hbm [resolvable:$true] %s55
      %s57 = sshll.u32 [#allocation8], 4
      %s58 = int_to_ptr.vmem [resolvable:$true] %s57
      %63 = dma.hbm_to_vmem [thread:$0]  %s56, 1024, %s58, [#allocation9], 64, 64, 4
    $region17: #{tpu_custom_call.1} parent=1 // pred_fallthru
      _
    // Predicated region
    $region18: #{tpu_custom_call.1} parent=1 // pred_check
      _
    $region19: #{tpu_custom_call.1} parent=1 // pred_check_branch
      %65 = sbr.rel (0) target = $region21
    $region20: #{tpu_custom_call.1} parent=1 // pred_region
      %67 = vsyncadd [#allocation9], 0
      %s69 = sshll.u32 %s4, 4
      %s70 = int_to_ptr.hbm [resolvable:$true] %s69
      %s71 = sshll.u32 [#allocation10], 4
      %s72 = int_to_ptr.vmem [resolvable:$true] %s71
      %74 = dma.hbm_to_vmem [thread:$0]  %s70, 64, %s72, [#allocation9]
    $region21: #{tpu_custom_call.1} parent=1 // pred_fallthru
      _
    // Predicated region
    $region22: #{tpu_custom_call.1} parent=1 // pred_check
      _
    $region23: #{tpu_custom_call.1} parent=1 // pred_check_branch
      %76 = sbr.rel (0) target = $region25
    $region24: #{tpu_custom_call.1} parent=1 // pred_region
      %78 = dma.done [#allocation3], 128
    $region25: #{tpu_custom_call.1} parent=1 // pred_fallthru
      _
    // Predicated region
    $region26: #{tpu_custom_call.1} parent=1 // pred_check
      _
    $region27: #{tpu_custom_call.1} parent=1 // pred_check_branch
      %80 = sbr.rel (0) target = $region29
    $region28: #{tpu_custom_call.1} parent=1 // pred_region
      %82 = dma.done [#allocation6], 8192
    $region29: #{tpu_custom_call.1} parent=1 // pred_fallthru
      _
    // Predicated region
    $region30: #{tpu_custom_call.1} parent=1 // pred_check
      _
    $region31: #{tpu_custom_call.1} parent=1 // pred_check_branch
      %84 = sbr.rel (0) target = $region33
    $region32: #{tpu_custom_call.1} parent=1 // pred_region
      %86 = dma.done [#allocation6], 1024
    $region33: #{tpu_custom_call.1} parent=1 // pred_fallthru
      _
    // Predicated region
    $region34: #{tpu_custom_call.1} parent=1 // pred_check
      _
    $region35: #{tpu_custom_call.1} parent=1 // pred_check_branch
      %88 = sbr.rel (0) target = $region37
    $region36: #{tpu_custom_call.1} parent=1 // pred_region
      %90 = dma.done [#allocation9], 1024
    $region37: #{tpu_custom_call.1} parent=1 // pred_fallthru
      _
    // Predicated region
    $region38: #{tpu_custom_call.1} parent=1 // pred_check
      _
    $region39: #{tpu_custom_call.1} parent=1 // pred_check_branch
      %92 = sbr.rel (0) target = $region41
    $region40: #{tpu_custom_call.1} parent=1 // pred_region
      %94 = dma.done [#allocation9], 64
    $region41: #{tpu_custom_call.1} parent=1 // pred_fallthru
      _
    %v95 = vld [vmem:[#allocation2] sm:$0xff]
    %v96 = vld [vmem:[#allocation5] sm:$0xf]
    %v97 = vld [vmem:[#allocation5 + $0x4] sm:$0xf]
    %v98 = vld [vmem:[#allocation5 + $0x8] sm:$0xf]
    %v99 = vld [vmem:[#allocation5 + $0xc] sm:$0xf]
    %v100 = vld [vmem:[#allocation5 + $0x10] sm:$0xf]
    %v101 = vld [vmem:[#allocation5 + $0x14] sm:$0xf]
    %v102 = vld [vmem:[#allocation5 + $0x18] sm:$0xf]
    %v103 = vld [vmem:[#allocation5 + $0x1c] sm:$0xf]
    %v104 = vld [vmem:[#allocation5 + $0x20] sm:$0xf]
    %v105 = vld [vmem:[#allocation5 + $0x24] sm:$0xf]
    %v106 = vld [vmem:[#allocation5 + $0x28] sm:$0xf]
    %v107 = vld [vmem:[#allocation5 + $0x2c] sm:$0xf]
    %v108 = vld [vmem:[#allocation5 + $0x30] sm:$0xf]
    %v109 = vld [vmem:[#allocation5 + $0x34] sm:$0xf]
    %v110 = vld [vmem:[#allocation5 + $0x38] sm:$0xf]
    %v111 = vld [vmem:[#allocation5 + $0x3c] sm:$0xf]
    %v112 = vld [vmem:[#allocation5 + $0x40] sm:$0xf]
    %v113 = vld [vmem:[#allocation5 + $0x44] sm:$0xf]
    %v114 = vld [vmem:[#allocation5 + $0x48] sm:$0xf]
    %v115 = vld [vmem:[#allocation5 + $0x4c] sm:$0xf]
    %v116 = vld [vmem:[#allocation5 + $0x50] sm:$0xf]
    %v117 = vld [vmem:[#allocation5 + $0x54] sm:$0xf]
    %v118 = vld [vmem:[#allocation5 + $0x58] sm:$0xf]
    %v119 = vld [vmem:[#allocation5 + $0x5c] sm:$0xf]
    %v120 = vld [vmem:[#allocation5 + $0x60] sm:$0xf]
    %v121 = vld [vmem:[#allocation5 + $0x64] sm:$0xf]
    %v122 = vld [vmem:[#allocation5 + $0x68] sm:$0xf]
    %v123 = vld [vmem:[#allocation5 + $0x6c] sm:$0xf]
    %v124 = vld [vmem:[#allocation5 + $0x70] sm:$0xf]
    %v125 = vld [vmem:[#allocation5 + $0x74] sm:$0xf]
    %v126 = vld [vmem:[#allocation5 + $0x78] sm:$0xf]
    %v127 = vld [vmem:[#allocation5 + $0x7c] sm:$0xf]
    %v128 = vld [vmem:[#allocation5 + $0x80] sm:$0xf]
    %v129 = vld [vmem:[#allocation5 + $0x84] sm:$0xf]
    %v130 = vld [vmem:[#allocation5 + $0x88] sm:$0xf]
    %v131 = vld [vmem:[#allocation5 + $0x8c] sm:$0xf]
    %v132 = vld [vmem:[#allocation5 + $0x90] sm:$0xf]
    %v133 = vld [vmem:[#allocation5 + $0x94] sm:$0xf]
    %v134 = vld [vmem:[#allocation5 + $0x98] sm:$0xf]
    %v135 = vld [vmem:[#allocation5 + $0x9c] sm:$0xf]
    %v136 = vld [vmem:[#allocation5 + $0xa0] sm:$0xf]
    %v137 = vld [vmem:[#allocation5 + $0xa4] sm:$0xf]
    %v138 = vld [vmem:[#allocation5 + $0xa8] sm:$0xf]
    %v139 = vld [vmem:[#allocation5 + $0xac] sm:$0xf]
    %v140 = vld [vmem:[#allocation5 + $0xb0] sm:$0xf]
    %v141 = vld [vmem:[#allocation5 + $0xb4] sm:$0xf]
    %v142 = vld [vmem:[#allocation5 + $0xb8] sm:$0xf]
    %v143 = vld [vmem:[#allocation5 + $0xbc] sm:$0xf]
    %v144 = vld [vmem:[#allocation5 + $0xc0] sm:$0xf]
    %v145 = vld [vmem:[#allocation5 + $0xc4] sm:$0xf]
    %v146 = vld [vmem:[#allocation5 + $0xc8] sm:$0xf]
    %v147 = vld [vmem:[#allocation5 + $0xcc] sm:$0xf]
    %v148 = vld [vmem:[#allocation5 + $0xd0] sm:$0xf]
    %v149 = vld [vmem:[#allocation5 + $0xd4] sm:$0xf]
    %v150 = vld [vmem:[#allocation5 + $0xd8] sm:$0xf]
    %v151 = vld [vmem:[#allocation5 + $0xdc] sm:$0xf]
    %v152 = vld [vmem:[#allocation5 + $0xe0] sm:$0xf]
    %v153 = vld [vmem:[#allocation5 + $0xe4] sm:$0xf]
    %v154 = vld [vmem:[#allocation5 + $0xe8] sm:$0xf]
    %v155 = vld [vmem:[#allocation5 + $0xec] sm:$0xf]
    %v156 = vld [vmem:[#allocation5 + $0xf0] sm:$0xf]
    %v157 = vld [vmem:[#allocation5 + $0xf4] sm:$0xf]
    %v158 = vld [vmem:[#allocation5 + $0xf8] sm:$0xf]
    %v159 = vld [vmem:[#allocation5 + $0xfc] sm:$0xf]
    %v160 = vld [vmem:[#allocation5 + $0x100] sm:$0xf]
    %v161 = vld [vmem:[#allocation5 + $0x104] sm:$0xf]
    %v162 = vld [vmem:[#allocation5 + $0x108] sm:$0xf]
    %v163 = vld [vmem:[#allocation5 + $0x10c] sm:$0xf]
    %v164 = vld [vmem:[#allocation5 + $0x110] sm:$0xf]
    %v165 = vld [vmem:[#allocation5 + $0x114] sm:$0xf]
    %v166 = vld [vmem:[#allocation5 + $0x118] sm:$0xf]
    %v167 = vld [vmem:[#allocation5 + $0x11c] sm:$0xf]
    %v168 = vld [vmem:[#allocation5 + $0x120] sm:$0xf]
    %v169 = vld [vmem:[#allocation5 + $0x124] sm:$0xf]
    %v170 = vld [vmem:[#allocation5 + $0x128] sm:$0xf]
    %v171 = vld [vmem:[#allocation5 + $0x12c] sm:$0xf]
    %v172 = vld [vmem:[#allocation5 + $0x130] sm:$0xf]
    %v173 = vld [vmem:[#allocation5 + $0x134] sm:$0xf]
    %v174 = vld [vmem:[#allocation5 + $0x138] sm:$0xf]
    %v175 = vld [vmem:[#allocation5 + $0x13c] sm:$0xf]
    %v176 = vld [vmem:[#allocation5 + $0x140] sm:$0xf]
    %v177 = vld [vmem:[#allocation5 + $0x144] sm:$0xf]
    %v178 = vld [vmem:[#allocation5 + $0x148] sm:$0xf]
    %v179 = vld [vmem:[#allocation5 + $0x14c] sm:$0xf]
    %v180 = vld [vmem:[#allocation5 + $0x150] sm:$0xf]
    %v181 = vld [vmem:[#allocation5 + $0x154] sm:$0xf]
    %v182 = vld [vmem:[#allocation5 + $0x158] sm:$0xf]
    %v183 = vld [vmem:[#allocation5 + $0x15c] sm:$0xf]
    %v184 = vld [vmem:[#allocation5 + $0x160] sm:$0xf]
    %v185 = vld [vmem:[#allocation5 + $0x164] sm:$0xf]
    %v186 = vld [vmem:[#allocation5 + $0x168] sm:$0xf]
    %v187 = vld [vmem:[#allocation5 + $0x16c] sm:$0xf]
    %v188 = vld [vmem:[#allocation5 + $0x170] sm:$0xf]
    %v189 = vld [vmem:[#allocation5 + $0x174] sm:$0xf]
    %v190 = vld [vmem:[#allocation5 + $0x178] sm:$0xf]
    %v191 = vld [vmem:[#allocation5 + $0x17c] sm:$0xf]
    %v192 = vld [vmem:[#allocation5 + $0x180] sm:$0xf]
    %v193 = vld [vmem:[#allocation5 + $0x184] sm:$0xf]
    %v194 = vld [vmem:[#allocation5 + $0x188] sm:$0xf]
    %v195 = vld [vmem:[#allocation5 + $0x18c] sm:$0xf]
    %v196 = vld [vmem:[#allocation5 + $0x190] sm:$0xf]
    %v197 = vld [vmem:[#allocation5 + $0x194] sm:$0xf]
    %v198 = vld [vmem:[#allocation5 + $0x198] sm:$0xf]
    %v199 = vld [vmem:[#allocation5 + $0x19c] sm:$0xf]
    %v200 = vld [vmem:[#allocation5 + $0x1a0] sm:$0xf]
    %v201 = vld [vmem:[#allocation5 + $0x1a4] sm:$0xf]
    %v202 = vld [vmem:[#allocation5 + $0x1a8] sm:$0xf]
    %v203 = vld [vmem:[#allocation5 + $0x1ac] sm:$0xf]
    %v204 = vld [vmem:[#allocation5 + $0x1b0] sm:$0xf]
    %v205 = vld [vmem:[#allocation5 + $0x1b4] sm:$0xf]
    %v206 = vld [vmem:[#allocation5 + $0x1b8] sm:$0xf]
    %v207 = vld [vmem:[#allocation5 + $0x1bc] sm:$0xf]
    %v208 = vld [vmem:[#allocation5 + $0x1c0] sm:$0xf]
    %v209 = vld [vmem:[#allocation5 + $0x1c4] sm:$0xf]
    %v210 = vld [vmem:[#allocation5 + $0x1c8] sm:$0xf]
    %v211 = vld [vmem:[#allocation5 + $0x1cc] sm:$0xf]
    %v212 = vld [vmem:[#allocation5 + $0x1d0] sm:$0xf]
    %v213 = vld [vmem:[#allocation5 + $0x1d4] sm:$0xf]
    %v214 = vld [vmem:[#allocation5 + $0x1d8] sm:$0xf]
    %v215 = vld [vmem:[#allocation5 + $0x1dc] sm:$0xf]
    %v216 = vld [vmem:[#allocation5 + $0x1e0] sm:$0xf]
    %v217 = vld [vmem:[#allocation5 + $0x1e4] sm:$0xf]
    %v218 = vld [vmem:[#allocation5 + $0x1e8] sm:$0xf]
    %v219 = vld [vmem:[#allocation5 + $0x1ec] sm:$0xf]
    %v220 = vld [vmem:[#allocation5 + $0x1f0] sm:$0xf]
    %v221 = vld [vmem:[#allocation5 + $0x1f4] sm:$0xf]
    %v222 = vld [vmem:[#allocation5 + $0x1f8] sm:$0xf]
    %v223 = vld [vmem:[#allocation5 + $0x1fc] sm:$0xf]
    %v224 = vld [vmem:[#allocation10] sm:$0x1]
    %v225 = vperm.slane %v224, 0
    %227 = vst [vmem:[#allocation1] ss:$9 sm:$0xff] %v95
    %v228 = vld [vmem:[#allocation1] sm:$0xff]
    %v229 = vld [vmem:[#allocation1 + $0x9] sm:$0xff]
    %v230 = vld [vmem:[#allocation1 + $0x12] sm:$0xff]
    %v231 = vld [vmem:[#allocation1 + $0x1b] sm:$0xff]
    %v232 = vld [vmem:[#allocation1 + $0x24] sm:$0xff]
    %v233 = vld [vmem:[#allocation1 + $0x2d] sm:$0xff]
    %v234 = vld [vmem:[#allocation1 + $0x36] sm:$0xff]
    %v235 = vld [vmem:[#allocation1 + $0x3f] sm:$0xff]
    %v372 = vunpack.c.l.b16 %v96
    %v373 = vunpack.c.l.b16 %v97
    %v374 = vunpack.c.l.b16 %v98
    %v375 = vunpack.c.l.b16 %v99
    %v376 = vunpack.c.l.b16 %v100
    %v377 = vunpack.c.l.b16 %v101
    %v378 = vunpack.c.l.b16 %v102
    %v379 = vunpack.c.l.b16 %v103
    %v380 = vunpack.c.l.b16 %v104
    %v381 = vunpack.c.l.b16 %v105
    %v382 = vunpack.c.l.b16 %v106
    %v383 = vunpack.c.l.b16 %v107
    %v384 = vunpack.c.l.b16 %v108
    %v385 = vunpack.c.l.b16 %v109
    %v386 = vunpack.c.l.b16 %v110
    %v387 = vunpack.c.l.b16 %v111
    %v388 = vunpack.c.l.b16 %v112
    %v389 = vunpack.c.l.b16 %v113
    %v390 = vunpack.c.l.b16 %v114
    %v391 = vunpack.c.l.b16 %v115
    %v392 = vunpack.c.l.b16 %v116
    %v393 = vunpack.c.l.b16 %v117
    %v394 = vunpack.c.l.b16 %v118
    %v395 = vunpack.c.l.b16 %v119
    %v396 = vunpack.c.l.b16 %v120
    %v397 = vunpack.c.l.b16 %v121
    %v398 = vunpack.c.l.b16 %v122
    %v399 = vunpack.c.l.b16 %v123
    %v400 = vunpack.c.l.b16 %v124
    %v401 = vunpack.c.l.b16 %v125
    %v402 = vunpack.c.l.b16 %v126
    %v403 = vunpack.c.l.b16 %v127
    %v404 = vunpack.c.l.b16 %v128
    %v405 = vunpack.c.l.b16 %v129
    %v406 = vunpack.c.l.b16 %v130
    %v407 = vunpack.c.l.b16 %v131
    %v408 = vunpack.c.l.b16 %v132
    %v409 = vunpack.c.l.b16 %v133
    %v410 = vunpack.c.l.b16 %v134
    %v411 = vunpack.c.l.b16 %v135
    %v412 = vunpack.c.l.b16 %v136
    %v413 = vunpack.c.l.b16 %v137
    %v414 = vunpack.c.l.b16 %v138
    %v415 = vunpack.c.l.b16 %v139
    %v416 = vunpack.c.l.b16 %v140
    %v417 = vunpack.c.l.b16 %v141
    %v418 = vunpack.c.l.b16 %v142
    %v419 = vunpack.c.l.b16 %v143
    %v420 = vunpack.c.l.b16 %v144
    %v421 = vunpack.c.l.b16 %v145
    %v422 = vunpack.c.l.b16 %v146
    %v423 = vunpack.c.l.b16 %v147
    %v424 = vunpack.c.l.b16 %v148
    %v425 = vunpack.c.l.b16 %v149
    %v426 = vunpack.c.l.b16 %v150
    %v427 = vunpack.c.l.b16 %v151
    %v428 = vunpack.c.l.b16 %v152
    %v429 = vunpack.c.l.b16 %v153
    %v430 = vunpack.c.l.b16 %v154
    %v431 = vunpack.c.l.b16 %v155
    %v432 = vunpack.c.l.b16 %v156
    %v433 = vunpack.c.l.b16 %v157
    %v434 = vunpack.c.l.b16 %v158
    %v435 = vunpack.c.l.b16 %v159
    %v436 = vunpack.c.l.b16 %v160
    %v437 = vunpack.c.l.b16 %v161
    %v438 = vunpack.c.l.b16 %v162
    %v439 = vunpack.c.l.b16 %v163
    %v440 = vunpack.c.l.b16 %v164
    %v441 = vunpack.c.l.b16 %v165
    %v442 = vunpack.c.l.b16 %v166
    %v443 = vunpack.c.l.b16 %v167
    %v444 = vunpack.c.l.b16 %v168
    %v445 = vunpack.c.l.b16 %v169
    %v446 = vunpack.c.l.b16 %v170
    %v447 = vunpack.c.l.b16 %v171
    %v448 = vunpack.c.l.b16 %v172
    %v449 = vunpack.c.l.b16 %v173
    %v450 = vunpack.c.l.b16 %v174
    %v451 = vunpack.c.l.b16 %v175
    %v452 = vunpack.c.l.b16 %v176
    %v453 = vunpack.c.l.b16 %v177
    %v454 = vunpack.c.l.b16 %v178
    %v455 = vunpack.c.l.b16 %v179
    %v456 = vunpack.c.l.b16 %v180
    %v457 = vunpack.c.l.b16 %v181
    %v458 = vunpack.c.l.b16 %v182
    %v459 = vunpack.c.l.b16 %v183
    %v460 = vunpack.c.l.b16 %v184
    %v461 = vunpack.c.l.b16 %v185
    %v462 = vunpack.c.l.b16 %v186
    %v463 = vunpack.c.l.b16 %v187
    %v464 = vunpack.c.l.b16 %v188
    %v465 = vunpack.c.l.b16 %v189
    %v466 = vunpack.c.l.b16 %v190
    %v467 = vunpack.c.l.b16 %v191
    %v468 = vunpack.c.l.b16 %v192
    %v469 = vunpack.c.l.b16 %v193
    %v470 = vunpack.c.l.b16 %v194
    %v471 = vunpack.c.l.b16 %v195
    %v472 = vunpack.c.l.b16 %v196
    %v473 = vunpack.c.l.b16 %v197
    %v474 = vunpack.c.l.b16 %v198
    %v475 = vunpack.c.l.b16 %v199
    %v476 = vunpack.c.l.b16 %v200
    %v477 = vunpack.c.l.b16 %v201
    %v478 = vunpack.c.l.b16 %v202
    %v479 = vunpack.c.l.b16 %v203
    %v480 = vunpack.c.l.b16 %v204
    %v481 = vunpack.c.l.b16 %v205
    %v482 = vunpack.c.l.b16 %v206
    %v483 = vunpack.c.l.b16 %v207
    %v484 = vunpack.c.l.b16 %v208
    %v485 = vunpack.c.l.b16 %v209
    %v486 = vunpack.c.l.b16 %v210
    %v487 = vunpack.c.l.b16 %v211
    %v488 = vunpack.c.l.b16 %v212
    %v489 = vunpack.c.l.b16 %v213
    %v490 = vunpack.c.l.b16 %v214
    %v491 = vunpack.c.l.b16 %v215
    %v492 = vunpack.c.l.b16 %v216
    %v493 = vunpack.c.l.b16 %v217
    %v494 = vunpack.c.l.b16 %v218
    %v495 = vunpack.c.l.b16 %v219
    %v496 = vunpack.c.l.b16 %v220
    %v497 = vunpack.c.l.b16 %v221
    %v498 = vunpack.c.l.b16 %v222
    %v499 = vunpack.c.l.b16 %v223
    %v500 = vpack.c.b16 %v373, %v372
    %v501 = vpack.c.b16 %v375, %v374
    %v502 = vpack.c.b16 %v377, %v376
    %v503 = vpack.c.b16 %v379, %v378
    %v504 = vpack.c.b16 %v381, %v380
    %v505 = vpack.c.b16 %v383, %v382
    %v506 = vpack.c.b16 %v385, %v384
    %v507 = vpack.c.b16 %v387, %v386
    %v508 = vpack.c.b16 %v389, %v388
    %v509 = vpack.c.b16 %v391, %v390
    %v510 = vpack.c.b16 %v393, %v392
    %v511 = vpack.c.b16 %v395, %v394
    %v512 = vpack.c.b16 %v397, %v396
    %v513 = vpack.c.b16 %v399, %v398
    %v514 = vpack.c.b16 %v401, %v400
    %v515 = vpack.c.b16 %v403, %v402
    %v516 = vpack.c.b16 %v405, %v404
    %v517 = vpack.c.b16 %v407, %v406
    %v518 = vpack.c.b16 %v409, %v408
    %v519 = vpack.c.b16 %v411, %v410
    %v520 = vpack.c.b16 %v413, %v412
    %v521 = vpack.c.b16 %v415, %v414
    %v522 = vpack.c.b16 %v417, %v416
    %v523 = vpack.c.b16 %v419, %v418
    %v524 = vpack.c.b16 %v421, %v420
    %v525 = vpack.c.b16 %v423, %v422
    %v526 = vpack.c.b16 %v425, %v424
    %v527 = vpack.c.b16 %v427, %v426
    %v528 = vpack.c.b16 %v429, %v428
    %v529 = vpack.c.b16 %v431, %v430
    %v530 = vpack.c.b16 %v433, %v432
    %v531 = vpack.c.b16 %v435, %v434
    %v532 = vpack.c.b16 %v437, %v436
    %v533 = vpack.c.b16 %v439, %v438
    %v534 = vpack.c.b16 %v441, %v440
    %v535 = vpack.c.b16 %v443, %v442
    %v536 = vpack.c.b16 %v445, %v444
    %v537 = vpack.c.b16 %v447, %v446
    %v538 = vpack.c.b16 %v449, %v448
    %v539 = vpack.c.b16 %v451, %v450
    %v540 = vpack.c.b16 %v453, %v452
    %v541 = vpack.c.b16 %v455, %v454
    %v542 = vpack.c.b16 %v457, %v456
    %v543 = vpack.c.b16 %v459, %v458
    %v544 = vpack.c.b16 %v461, %v460
    %v545 = vpack.c.b16 %v463, %v462
    %v546 = vpack.c.b16 %v465, %v464
    %v547 = vpack.c.b16 %v467, %v466
    %v548 = vpack.c.b16 %v469, %v468
    %v549 = vpack.c.b16 %v471, %v470
    %v550 = vpack.c.b16 %v473, %v472
    %v551 = vpack.c.b16 %v475, %v474
    %v552 = vpack.c.b16 %v477, %v476
    %v553 = vpack.c.b16 %v479, %v478
    %v554 = vpack.c.b16 %v481, %v480
    %v555 = vpack.c.b16 %v483, %v482
    %v556 = vpack.c.b16 %v485, %v484
    %v557 = vpack.c.b16 %v487, %v486
    %v558 = vpack.c.b16 %v489, %v488
    %v559 = vpack.c.b16 %v491, %v490
    %v560 = vpack.c.b16 %v493, %v492
    %v561 = vpack.c.b16 %v495, %v494
    %v562 = vpack.c.b16 %v497, %v496
    %v563 = vpack.c.b16 %v499, %v498
    %628 = vmatpush.bf16.msra.mxu0 %v507
    %629 = vmatpush.bf16.msra.mxu0 %v506
    %630 = vmatpush.bf16.msra.mxu0 %v505
    %631 = vmatpush.bf16.msra.mxu0 %v504
    %632 = vmatpush.bf16.msra.mxu0 %v503
    %633 = vmatpush.bf16.msra.mxu0 %v502
    %634 = vmatpush.bf16.msra.mxu0 %v501
    %635 = vmatpush.bf16.msra.mxu0 %v500
    %636 = vmatmul.bf16.gmra.mxu0 %v228
    %v637 = vpop.f32.mrf.mxu0
    %v638 = vadd.f32 %v225, %v637
    %v639 = vpop.f32.mrf.mxu0
    %640 = vdwg.mxu0
    %641 = vmatpush.bf16.msra.mxu0 %v515
    %642 = vmatpush.bf16.msra.mxu0 %v514
    %643 = vmatpush.bf16.msra.mxu0 %v513
    %644 = vmatpush.bf16.msra.mxu0 %v512
    %645 = vmatpush.bf16.msra.mxu0 %v511
    %646 = vmatpush.bf16.msra.mxu0 %v510
    %647 = vmatpush.bf16.msra.mxu0 %v509
    %648 = vmatpush.bf16.msra.mxu0 %v508
    %649 = vmatmul.bf16.gmra.mxu0 %v229
    %v650 = vpop.f32.mrf.mxu0
    %v651 = vadd.f32 %v638, %v650
    %v652 = vpop.f32.mrf.mxu0
    %653 = vdwg.mxu0
    %654 = vmatpush.bf16.msra.mxu0 %v523
    %655 = vmatpush.bf16.msra.mxu0 %v522
    %656 = vmatpush.bf16.msra.mxu0 %v521
    %657 = vmatpush.bf16.msra.mxu0 %v520
    %658 = vmatpush.bf16.msra.mxu0 %v519
    %659 = vmatpush.bf16.msra.mxu0 %v518
    %660 = vmatpush.bf16.msra.mxu0 %v517
    %661 = vmatpush.bf16.msra.mxu0 %v516
    %662 = vmatmul.bf16.gmra.mxu0 %v230
    %v663 = vpop.f32.mrf.mxu0
    %v664 = vadd.f32 %v651, %v663
    %v665 = vpop.f32.mrf.mxu0
    %666 = vdwg.mxu0
    %667 = vmatpush.bf16.msra.mxu0 %v531
    %668 = vmatpush.bf16.msra.mxu0 %v530
    %669 = vmatpush.bf16.msra.mxu0 %v529
    %670 = vmatpush.bf16.msra.mxu0 %v528
    %671 = vmatpush.bf16.msra.mxu0 %v527
    %672 = vmatpush.bf16.msra.mxu0 %v526
    %673 = vmatpush.bf16.msra.mxu0 %v525
    %674 = vmatpush.bf16.msra.mxu0 %v524
    %675 = vmatmul.bf16.gmra.mxu0 %v231
    %v676 = vpop.f32.mrf.mxu0
    %v677 = vadd.f32 %v664, %v676
    %v678 = vpop.f32.mrf.mxu0
    %679 = vdwg.mxu0
    %680 = vmatpush.bf16.msra.mxu0 %v539
    %681 = vmatpush.bf16.msra.mxu0 %v538
    %682 = vmatpush.bf16.msra.mxu0 %v537
    %683 = vmatpush.bf16.msra.mxu0 %v536
    %684 = vmatpush.bf16.msra.mxu0 %v535
    %685 = vmatpush.bf16.msra.mxu0 %v534
    %686 = vmatpush.bf16.msra.mxu0 %v533
    %687 = vmatpush.bf16.msra.mxu0 %v532
    %688 = vmatmul.bf16.gmra.mxu0 %v232
    %v689 = vpop.f32.mrf.mxu0
    %v690 = vadd.f32 %v677, %v689
    %v691 = vpop.f32.mrf.mxu0
    %692 = vdwg.mxu0
    %693 = vmatpush.bf16.msra.mxu0 %v547
    %694 = vmatpush.bf16.msra.mxu0 %v546
    %695 = vmatpush.bf16.msra.mxu0 %v545
    %696 = vmatpush.bf16.msra.mxu0 %v544
    %697 = vmatpush.bf16.msra.mxu0 %v543
    %698 = vmatpush.bf16.msra.mxu0 %v542
    %699 = vmatpush.bf16.msra.mxu0 %v541
    %700 = vmatpush.bf16.msra.mxu0 %v540
    %701 = vmatmul.bf16.gmra.mxu0 %v233
    %v702 = vpop.f32.mrf.mxu0
    %v703 = vadd.f32 %v690, %v702
    %v704 = vpop.f32.mrf.mxu0
    %705 = vdwg.mxu0
    %706 = vmatpush.bf16.msra.mxu0 %v555
    %707 = vmatpush.bf16.msra.mxu0 %v554
    %708 = vmatpush.bf16.msra.mxu0 %v553
    %709 = vmatpush.bf16.msra.mxu0 %v552
    %710 = vmatpush.bf16.msra.mxu0 %v551
    %711 = vmatpush.bf16.msra.mxu0 %v550
    %712 = vmatpush.bf16.msra.mxu0 %v549
    %713 = vmatpush.bf16.msra.mxu0 %v548
    %714 = vmatmul.bf16.gmra.mxu0 %v234
    %v715 = vpop.f32.mrf.mxu0
    %v716 = vadd.f32 %v703, %v715
    %v717 = vpop.f32.mrf.mxu0
    %718 = vdwg.mxu0
    %719 = vmatpush.bf16.msra.mxu0 %v563
    %720 = vmatpush.bf16.msra.mxu0 %v562
    %721 = vmatpush.bf16.msra.mxu0 %v561
    %722 = vmatpush.bf16.msra.mxu0 %v560
    %723 = vmatpush.bf16.msra.mxu0 %v559
    %724 = vmatpush.bf16.msra.mxu0 %v558
    %725 = vmatpush.bf16.msra.mxu0 %v557
    %726 = vmatpush.bf16.msra.mxu0 %v556
    %727 = vmatmul.bf16.gmra.mxu0 %v235
    %v728 = vpop.f32.mrf.mxu0
    %v729 = vadd.f32 %v716, %v728
    %v730 = vpop.f32.mrf.mxu0
    %731 = vdwg.mxu0
    %v732 = vmax.f32 %v729, 0.0
    %v733 = vpack.c.bf16 %v732, %v732
    %v734 = vld [vmem:[#allocation7] sm:$0xf]
    %v735 = vld [vmem:[#allocation7 + $0x4] sm:$0xf]
    %v736 = vld [vmem:[#allocation7 + $0x8] sm:$0xf]
    %v737 = vld [vmem:[#allocation7 + $0xc] sm:$0xf]
    %v738 = vld [vmem:[#allocation7 + $0x10] sm:$0xf]
    %v739 = vld [vmem:[#allocation7 + $0x14] sm:$0xf]
    %v740 = vld [vmem:[#allocation7 + $0x18] sm:$0xf]
    %v741 = vld [vmem:[#allocation7 + $0x1c] sm:$0xf]
    %v742 = vld [vmem:[#allocation7 + $0x20] sm:$0xf]
    %v743 = vld [vmem:[#allocation7 + $0x24] sm:$0xf]
    %v744 = vld [vmem:[#allocation7 + $0x28] sm:$0xf]
    %v745 = vld [vmem:[#allocation7 + $0x2c] sm:$0xf]
    %v746 = vld [vmem:[#allocation7 + $0x30] sm:$0xf]
    %v747 = vld [vmem:[#allocation7 + $0x34] sm:$0xf]
    %v748 = vld [vmem:[#allocation7 + $0x38] sm:$0xf]
    %v749 = vld [vmem:[#allocation7 + $0x3c] sm:$0xf]
    %v750 = vld [vmem:[#allocation10 + $0x1] sm:$0x1]
    %v751 = vperm.slane %v750, 0
    %v768 = vunpack.c.l.b16 %v734
    %v769 = vunpack.c.l.b16 %v735
    %v770 = vunpack.c.l.b16 %v736
    %v771 = vunpack.c.l.b16 %v737
    %v772 = vunpack.c.l.b16 %v738
    %v773 = vunpack.c.l.b16 %v739
    %v774 = vunpack.c.l.b16 %v740
    %v775 = vunpack.c.l.b16 %v741
    %v776 = vunpack.c.l.b16 %v742
    %v777 = vunpack.c.l.b16 %v743
    %v778 = vunpack.c.l.b16 %v744
    %v779 = vunpack.c.l.b16 %v745
    %v780 = vunpack.c.l.b16 %v746
    %v781 = vunpack.c.l.b16 %v747
    %v782 = vunpack.c.l.b16 %v748
    %v783 = vunpack.c.l.b16 %v749
    %v784 = vpack.c.b16 %v769, %v768
    %v785 = vpack.c.b16 %v771, %v770
    %v786 = vpack.c.b16 %v773, %v772
    %v787 = vpack.c.b16 %v775, %v774
    %v788 = vpack.c.b16 %v777, %v776
    %v789 = vpack.c.b16 %v779, %v778
    %v790 = vpack.c.b16 %v781, %v780
    %v791 = vpack.c.b16 %v783, %v782
    %800 = vmatpush.bf16.msra.mxu0 %v791
    %801 = vmatpush.bf16.msra.mxu0 %v790
    %802 = vmatpush.bf16.msra.mxu0 %v789
    %803 = vmatpush.bf16.msra.mxu0 %v788
    %804 = vmatpush.bf16.msra.mxu0 %v787
    %805 = vmatpush.bf16.msra.mxu0 %v786
    %806 = vmatpush.bf16.msra.mxu0 %v785
    %807 = vmatpush.bf16.msra.mxu0 %v784
    %808 = vmatmul.bf16.gmra.mxu0 %v733
    %v809 = vpop.f32.mrf.mxu0
    %v810 = vadd.f32 %v751, %v809
    %v811 = vpop.f32.mrf.mxu0
    %812 = vdwg.mxu0
    %v813 = vmax.f32 %v810, 0.0
    %v814 = vpack.c.bf16 %v813, %v813
    %v815 = vld [vmem:[#allocation8] sm:$0xf]
    %v816 = vld [vmem:[#allocation8 + $0x4] sm:$0xf]
    %v817 = vld [vmem:[#allocation8 + $0x8] sm:$0xf]
    %v818 = vld [vmem:[#allocation8 + $0xc] sm:$0xf]
    %v819 = vld [vmem:[#allocation8 + $0x10] sm:$0xf]
    %v820 = vld [vmem:[#allocation8 + $0x14] sm:$0xf]
    %v821 = vld [vmem:[#allocation8 + $0x18] sm:$0xf]
    %v822 = vld [vmem:[#allocation8 + $0x1c] sm:$0xf]
    %v823 = vld [vmem:[#allocation8 + $0x20] sm:$0xf]
    %v824 = vld [vmem:[#allocation8 + $0x24] sm:$0xf]
    %v825 = vld [vmem:[#allocation8 + $0x28] sm:$0xf]
    %v826 = vld [vmem:[#allocation8 + $0x2c] sm:$0xf]
    %v827 = vld [vmem:[#allocation8 + $0x30] sm:$0xf]
    %v828 = vld [vmem:[#allocation8 + $0x34] sm:$0xf]
    %v829 = vld [vmem:[#allocation8 + $0x38] sm:$0xf]
    %v830 = vld [vmem:[#allocation8 + $0x3c] sm:$0xf]
    %v831 = vld [vmem:[#allocation10 + $0x2] sm:$0x1]
    %v832 = vperm.slane %v831, 0
    %v849 = vunpack.c.l.b16 %v815
    %v850 = vunpack.c.l.b16 %v816
    %v851 = vunpack.c.l.b16 %v817
    %v852 = vunpack.c.l.b16 %v818
    %v853 = vunpack.c.l.b16 %v819
    %v854 = vunpack.c.l.b16 %v820
    %v855 = vunpack.c.l.b16 %v821
    %v856 = vunpack.c.l.b16 %v822
    %v857 = vunpack.c.l.b16 %v823
    %v858 = vunpack.c.l.b16 %v824
    %v859 = vunpack.c.l.b16 %v825
    %v860 = vunpack.c.l.b16 %v826
    %v861 = vunpack.c.l.b16 %v827
    %v862 = vunpack.c.l.b16 %v828
    %v863 = vunpack.c.l.b16 %v829
    %v864 = vunpack.c.l.b16 %v830
    %v865 = vpack.c.b16 %v850, %v849
    %v866 = vpack.c.b16 %v852, %v851
    %v867 = vpack.c.b16 %v854, %v853
    %v868 = vpack.c.b16 %v856, %v855
    %v869 = vpack.c.b16 %v858, %v857
    %v870 = vpack.c.b16 %v860, %v859
    %v871 = vpack.c.b16 %v862, %v861
    %v872 = vpack.c.b16 %v864, %v863
    %881 = vmatpush.bf16.msra.mxu0 %v872
    %882 = vmatpush.bf16.msra.mxu0 %v871
    %883 = vmatpush.bf16.msra.mxu0 %v870
    %884 = vmatpush.bf16.msra.mxu0 %v869
    %885 = vmatpush.bf16.msra.mxu0 %v868
    %886 = vmatpush.bf16.msra.mxu0 %v867
    %887 = vmatpush.bf16.msra.mxu0 %v866
    %888 = vmatpush.bf16.msra.mxu0 %v865
    %889 = vmatmul.bf16.gmra.mxu0 %v814
    %v890 = vpop.f32.mrf.mxu0
    %v891 = vadd.f32 %v832, %v890
    %v892 = vpop.f32.mrf.mxu0
    %893 = vdwg.mxu0
    %894 = vst [vmem:[#allocation11] sm:$0x3] %v891
    // Predicated region
    $region42: #{tpu_custom_call.1} parent=1 // pred_check
      _
    $region43: #{tpu_custom_call.1} parent=1 // pred_check_branch
      %896 = sbr.rel (0) target = $region45
    $region44: #{tpu_custom_call.1} parent=1 // pred_region
      %898 = vsyncadd [#allocation4], 0
      %s900 = sshll.u32 [#allocation11], 4
      %s901 = int_to_ptr.vmem [resolvable:$true] %s900
      %s902 = sshll.u32 %s5, 4
      %s903 = int_to_ptr.hbm [resolvable:$true] %s902
      %905 = dma.vmem_to_hbm [thread:$0]  %s901, 32, %s903, [#allocation4]
    $region45: #{tpu_custom_call.1} parent=1 // pred_fallthru
      _
    // Predicated region
    $region46: #{tpu_custom_call.1} parent=1 // pred_check
      _
    $region47: #{tpu_custom_call.1} parent=1 // pred_check_branch
      %907 = sbr.rel (0) target = $region49
    $region48: #{tpu_custom_call.1} parent=1 // pred_region
      %909 = dma.done [#allocation4], 32
    $region49: #{tpu_custom_call.1} parent=1 // pred_fallthru
      _
    %910 = vsyncpa [#allocation3], 1
    %911 = vsyncpa [#allocation6], 1
    %912 = vsyncpa [#allocation9], 1
    %913 = vsyncpa [#allocation4], 1

</llo_original>
